<compile_context>
chip_gen: v7x
topology: tpu7x:2x2x1
jax: 0.10.0
libtpu: 0.0.40
codegen_flags: <defaults>
</compile_context>

<pallas_src>
import math
import functools

import jax
import jax.numpy as jnp
from jax.experimental import pallas as pl
from jax.experimental.pallas import tpu as pltpu

_MIB = 1024 * 1024


def _round_up(n, m):
    return ((n + m - 1) // m) * m


def _physical_vmem_bytes():
    """Per-TensorCore VMEM capacity (128 MiB on v5e/v6e, 64 MiB on v7x)."""
    try:
        info = pltpu.get_tpu_info()
        v = getattr(info, "vmem_capacity_bytes", None)
        if v:
            return int(v)
    except Exception:
        pass
    try:
        kind = jax.devices()[0].device_kind.lower()
        if "v7" in kind:
            return 64 * _MIB
    except Exception:
        pass
    return 128 * _MIB


def _vmem_budget_bytes():
    # ~96 MiB on 128 MiB chips, ~44 MiB on 64 MiB chips: leaves headroom for
    # Mosaic internal scratch instead of a flat 48 MiB cap.
    phys = _physical_vmem_bytes()
    return min(phys - 20 * _MIB, (phys * 3) // 4)


def _resident_vmem_bytes(tb, d, k_pad, out_bytes):
    x_tile = tb * d * 4 * 2                 # f32 x tile, double-buffered
    w_slab = d * k_pad * 2 * 1              # bf16 slab, single-buffered
    o_tile = tb * k_pad * out_bytes * 2     # output tile, double-buffered
    return x_tile + w_slab + o_tile


def _ktiled_vmem_bytes(tb, tn, d, out_bytes):
    x_tile = tb * d * 4 * 2
    w_tile = d * tn * 2 * 2                 # streamed weight tile, double-buffered
    o_tile = tb * tn * out_bytes * 2
    return x_tile + w_tile + o_tile


def _pick_batch_tile(b, tb_cap):
    """16-aligned batch tile, <= tb_cap, aiming for >=2 (even) tiles so v7x's
    second TensorCore has work, and tiles sized to minimise ragged-tail waste."""
    if b <= 16:
        return _round_up(b, 8)
    if b <= 2 * tb_cap:
        return min(tb_cap, _round_up(pl.cdiv(b, 2), 16))
    n_tiles = pl.cdiv(b, tb_cap)
    if n_tiles % 2 == 1:
        n_tiles += 1
    return min(tb_cap, _round_up(pl.cdiv(b, n_tiles), 16))


def _fused_proto_kernel(x_ref, w_ref, o_ref):
    # Cast the f32 x tile to bf16 in-kernel (VPU work that hides under the
    # MXU/DMA) and do one MXU matmul with f32 accumulation.
    x = x_ref[...].astype(jnp.bfloat16)
    o_ref[...] = jnp.dot(
        x, w_ref[...], preferred_element_type=jnp.float32
    ).astype(o_ref.dtype)


@functools.partial(
    jax.jit,
    static_argnames=("tb", "tn", "k_tiled", "head_slices", "out_dtype", "vmem_limit"),
)
def _multi_proto_forward(x, w_slab, *, tb, tn, k_tiled, head_slices, out_dtype,
                         vmem_limit):
    """x: (B, D) float32, w_slab: (D, K_pad) bfloat16 -> list of (B, k_i)."""
    B, D = x.shape
    k_pad = w_slab.shape[1]
    out_bytes = jnp.dtype(out_dtype).itemsize
    n_b = pl.cdiv(B, tb)

    cost = pl.CostEstimate(
        flops=2 * B * D * k_pad,
        transcendentals=0,
        bytes_accessed=B * D * 4 + D * k_pad * 2 + B * k_pad * out_bytes,
    )

    if not k_tiled:
        # Resident weight slab (single-buffered), batch tiles pipelined.
        out = pl.pallas_call(
            _fused_proto_kernel,
            out_shape=jax.ShapeDtypeStruct((B, k_pad), out_dtype),
            grid=(n_b,),
            in_specs=[
                pl.BlockSpec((tb, D), lambda i: (i, 0)),
                pl.BlockSpec((D, k_pad), lambda i: (0, 0),
                             pipeline_mode=pl.Buffered(1)),
            ],
            out_specs=pl.BlockSpec((tb, k_pad), lambda i: (i, 0)),
            compiler_params=pltpu.CompilerParams(
                dimension_semantics=("parallel",),
                vmem_limit_bytes=vmem_limit,
            ),
            cost_estimate=cost,
        )(x, w_slab)
    else:
        # Very large K_total on small-VMEM chips: stream weight tiles along a
        # second grid axis. x block is constant in j, so it is fetched once
        # per batch row-tile (j is the inner grid axis).
        n_k = pl.cdiv(k_pad, tn)
        out = pl.pallas_call(
            _fused_proto_kernel,
            out_shape=jax.ShapeDtypeStruct((B, k_pad), out_dtype),
            grid=(n_b, n_k),
            in_specs=[
                pl.BlockSpec((tb, D), lambda i, j: (i, 0)),
                pl.BlockSpec((D, tn), lambda i, j: (0, j)),
            ],
            out_specs=pl.BlockSpec((tb, tn), lambda i, j: (i, j)),
            compiler_params=pltpu.CompilerParams(
                dimension_semantics=("parallel", "parallel"),
                vmem_limit_bytes=vmem_limit,
            ),
            cost_estimate=cost,
        )(x, w_slab)

    # Per-head slices (lane-aligned offsets when heads are large enough).
    return [out[:, off:off + k] for off, k in head_slices]


class MultiPrototypesPallas:
    """JAX/Pallas re-implementation of MultiPrototypes.forward."""

    def __init__(self, output_dim, nmb_prototypes, key, out_dtype=jnp.float32):
        self.output_dim = int(output_dim)
        self.ks = tuple(int(k) for k in nmb_prototypes)
        self.nmb_heads = len(self.ks)
        # out_dtype=jnp.bfloat16 halves the dominant output-writeback traffic
        # (near-2x when K_total is large); default f32 to match PyTorch.
        self.out_dtype = out_dtype

        # nn.Linear default init: U(-1/sqrt(fan_in), 1/sqrt(fan_in)).
        bound = 1.0 / math.sqrt(output_dim)
        self.weights_t = []  # list of (D, k_i) float32 for reference checks
        for k in self.ks:
            key, sub = jax.random.split(key)
            w = jax.random.uniform(
                sub, (k, output_dim), dtype=jnp.float32,
                minval=-bound, maxval=bound,
            )
            self.weights_t.append(jnp.transpose(w))

        # Pack per-head weights into one (D, K_pad) bf16 slab. Align each
        # head to a 128-column (lane) boundary when the padding overhead is
        # small; tiny heads pack contiguously.
        aligned_total = sum(_round_up(k, 128) for k in self.ks)
        packed_total = _round_up(sum(self.ks), 128)
        align_heads = aligned_total <= int(packed_total * 1.15)

        offsets, off = [], 0
        for k in self.ks:
            offsets.append(off)
            off += _round_up(k, 128) if align_heads else k
        self.k_pad = _round_up(aligned_total if align_heads else packed_total, 128)
        self.head_slices = tuple(zip(offsets, self.ks))

        slab = jnp.zeros((self.output_dim, self.k_pad), jnp.float32)
        for (o, k), w_t in zip(self.head_slices, self.weights_t):
            slab = slab.at[:, o:o + k].set(w_t)
        # TODO(synk): int8 weights would be a further ~2x on v5e/v6e but are
        # not portable to v7x's fp8-only MXU; keep bf16 for all generations.
        self.w_slab = slab.astype(jnp.bfloat16)

        self.vmem_budget = _vmem_budget_bytes()

    def __call__(self, x):
        B, D = x.shape
        assert D == self.output_dim, (D, self.output_dim)
        out_bytes = jnp.dtype(self.out_dtype).itemsize
        budget = int(self.vmem_budget * 0.9)

        # Generation-aware batch-tile cap: 512 on 128 MiB-VMEM chips, 256 on v7x.
        tb_cap = 512 if self.vmem_budget >= 64 * _MIB else 256
        tb = _pick_batch_tile(B, tb_cap)
        while tb > 16 and _resident_vmem_bytes(tb, D, self.k_pad, out_bytes) > budget:
            tb = max(16, _round_up(tb // 2, 16))

        k_tiled = _resident_vmem_bytes(tb, D, self.k_pad, out_bytes) > budget
        tn = self.k_pad
        if k_tiled:
            tn = min(self.k_pad, 2048)   # MXU-friendly multiple of 256
            while tn > 256 and _ktiled_vmem_bytes(tb, tn, D, out_bytes) > budget:
                tn = max(256, tn // 2)

        return _multi_proto_forward(
            x, self.w_slab,
            tb=tb, tn=tn, k_tiled=k_tiled,
            head_slices=self.head_slices,
            out_dtype=self.out_dtype,
            vmem_limit=self.vmem_budget,
        )


if __name__ == "__main__":
    key = jax.random.PRNGKey(0)
    k_x, k_w = jax.random.split(key)

    batch = 8
    output_dim = 32
    nmb_prototypes = (16, 24, 8)

    x = jax.random.normal(k_x, (batch, output_dim), dtype=jnp.float32)

    model = MultiPrototypesPallas(output_dim, nmb_prototypes, k_w)
    outs = model(x)
    outs = [jax.block_until_ready(o) for o in outs]

    # Reference checks.
    x_bf = x.astype(jnp.bfloat16).astype(jnp.float32)
    ok = True
    for o, w_t, k in zip(outs, model.weights_t, nmb_prototypes):
        assert o.shape == (batch, k), o.shape
        # bf16-input / f32-accumulate reference (matches kernel arithmetic).
        w_bf = w_t.astype(jnp.bfloat16).astype(jnp.float32)
        ref_bf16 = x_bf @ w_bf
        if not jnp.allclose(o.astype(jnp.float32), ref_bf16, atol=1e-3, rtol=1e-3):
            ok = False
        # Loose sanity check against the full-f32 reference.
        ref_f32 = x @ w_t
        if not jnp.allclose(o.astype(jnp.float32), ref_f32, atol=5e-2, rtol=5e-2):
            ok = False
    assert ok, "Pallas output mismatch vs reference"

    print("KERNEL_OK")
</pallas_src>

<mosaic_0001>
module attributes {stable_mosaic.version = 11 : i64} {
  func.func @_fused_proto_kernel(%arg0: i32, %arg1: memref<8x32xf32, #tpu.memory_space<vmem>>, %arg2: memref<32x128xbf16, #tpu.memory_space<vmem>>, %arg3: memref<8x128xf32, #tpu.memory_space<vmem>>) attributes {dimension_semantics = [#tpu.dimension_semantics<parallel>], iteration_bounds = array<i64: 1>, scalar_prefetch = 0 : i64, scratch_operands = 0 : i64, tpu.core_type = #tpu.core_type<tc>, window_params = [{transform_indices = @transform_0, window_bounds = array<i64: 8, 32>}, {pipeline_mode = #tpu.pipeline_mode<synchronous>, transform_indices = @transform_1, window_bounds = array<i64: 32, 128>}, {transform_indices = @transform_2, window_bounds = array<i64: 8, 128>}]} {
    %c0 = arith.constant 0 : index
    %c0_0 = arith.constant 0 : index
    %0 = vector.load %arg1[%c0, %c0_0] : memref<8x32xf32, #tpu.memory_space<vmem>>, vector<8x32xf32>
    %1 = arith.truncf %0 : vector<8x32xf32> to vector<8x32xbf16>
    %c0_1 = arith.constant 0 : index
    %c0_2 = arith.constant 0 : index
    %2 = vector.load %arg2[%c0_1, %c0_2] : memref<32x128xbf16, #tpu.memory_space<vmem>>, vector<32x128xbf16>
    %cst = arith.constant dense<0.000000e+00> : vector<8x128xf32>
    %3 = tpu.matmul %1, %2, %cst {dimension_numbers = #tpu.dot_dimension_numbers<[1], [0], [0], [1], [0, 0, 1, 1], [], []>} : vector<8x32xbf16>, vector<32x128xbf16>, vector<8x128xf32> -> vector<8x128xf32>
    %c0_3 = arith.constant 0 : index
    %c0_4 = arith.constant 0 : index
    %4 = vector.load %arg3[%c0_3, %c0_4] : memref<8x128xf32, #tpu.memory_space<vmem>>, vector<8x128xf32>
    tpu.vector_store %arg3[%c0_3, %c0_4], %3 {strides = array<i32>} : memref<8x128xf32, #tpu.memory_space<vmem>>, vector<8x128xf32>,
    return
  }
  func.func @transform_0(%arg0: i32) -> (i32, i32) {
    %c0_i32 = arith.constant 0 : i32
    %c0_i32_0 = arith.constant 0 : i32
    return %arg0, %c0_i32 : i32, i32
  }
  func.func @transform_1(%arg0: i32) -> (i32, i32) {
    %c0_i32 = arith.constant 0 : i32
    %c0_i32_0 = arith.constant 0 : i32
    %c0_i32_1 = arith.constant 0 : i32
    return %c0_i32, %c0_i32_0 : i32, i32
  }
  func.func @transform_2(%arg0: i32) -> (i32, i32) {
    %c0_i32 = arith.constant 0 : i32
    %c0_i32_0 = arith.constant 0 : i32
    return %arg0, %c0_i32 : i32, i32
  }
}

</mosaic_0001>

<llo_original>
// kernel: _multi_proto_forward.1
$region0: #{_multi_proto_forward.1}
  #allocation0 [shape = 'u32[]', space=smem, size = 0x4, offset = 0x4, fixed_abs, tag = 'smem constant byte address 0x4 - core index']
  #allocation1 [shape = 'u32[144,128]{1,0:T(1,128)}', space=vmem, size = 0x12000, scoped, tag = 'internal scratch']
  %s0 = inlined_call_operand.hbm [shape: f32[8,32], index: 0, kind: input, shape index: {}]
  %s1 = inlined_call_operand.hbm [shape: bf16[32,128], index: 1, kind: input, shape index: {}]
  %s2 = inlined_call_operand.hbm [shape: f32[8,128], index: 2, kind: output, shape index: {}]
  %s3 = sld [smem:[#allocation0]]
  $region26: #{_multi_proto_forward.1} parent=0
    _
  %s5 = ssub.s32 1, %s3
  %s6 = scalar_select 0, %s5, %s3
  $region1: #{_multi_proto_forward.1} parent=0
    #allocation2 [shape = 'u8[4096]{0}', space=vmem, size = 0x1000, scoped, tag = 'input window, operand 0, single buffered']
    #allocation3 [shape = 's32[1]{0}', space=sflag, size = 0x4, scoped, tag = 'scoped memory for _multi_proto_forward.1']
    #allocation4 [shape = 's32[1]{0}', space=sflag, size = 0x4, scoped, tag = 'scoped memory for _multi_proto_forward.1']
    #allocation5 [shape = 'u8[8192]{0}', space=vmem, size = 0x2000, scoped, tag = 'input window, operand 1, single buffered']
    #allocation6 [shape = 's32[1]{0}', space=sflag, size = 0x4, scoped, tag = 'scoped memory for _multi_proto_forward.1']
    #allocation7 [shape = 'u8[4096]{0}', space=vmem, size = 0x1000, scoped, tag = 'output window, operand 0, single buffered']
    %7 = vsyncpa [#allocation3], 0
    %8 = vsyncpa [#allocation6], 0
    %9 = vsyncpa [#allocation4], 0
    // Predicated region
    $region2: #{_multi_proto_forward.1} parent=1 // pred_check
      _
    $region3: #{_multi_proto_forward.1} parent=1 // pred_check_branch
      %11 = sbr.rel (0) target = $region5
    $region4: #{_multi_proto_forward.1} parent=1 // pred_region
      %s13 = ssub.s32 128, 128
      %14 = vsyncadd [#allocation3], %s13
      %s16 = sshll.u32 [#allocation2], 4
      %s17 = int_to_ptr.vmem [resolvable:$true] %s16
      %19 = dma.hbm_to_vmem [thread:$0]  %s0, 128, %s17, [#allocation3]
    $region5: #{_multi_proto_forward.1} parent=1 // pred_fallthru
      _
    // Predicated region
    $region6: #{_multi_proto_forward.1} parent=1 // pred_check
      _
    $region7: #{_multi_proto_forward.1} parent=1 // pred_check_branch
      %21 = sbr.rel (0) target = $region9
    $region8: #{_multi_proto_forward.1} parent=1 // pred_region
      %s23 = ssub.s32 256, 256
      %24 = vsyncadd [#allocation6], %s23
      %s25 = sshll.u32 [#allocation5], 4
      %s26 = int_to_ptr.vmem [resolvable:$true] %s25
      %31 = dma.hbm_to_vmem [thread:$0]  %s1, 256, %s26, [#allocation6], 64, 64, 4
    $region9: #{_multi_proto_forward.1} parent=1 // pred_fallthru
      _
    // Predicated region
    $region10: #{_multi_proto_forward.1} parent=1 // pred_check
      _
    $region11: #{_multi_proto_forward.1} parent=1 // pred_check_branch
      %33 = sbr.rel (0) target = $region13
    $region12: #{_multi_proto_forward.1} parent=1 // pred_region
      %34 = dma.done [#allocation3], 128
    $region13: #{_multi_proto_forward.1} parent=1 // pred_fallthru
      _
    // Predicated region
    $region14: #{_multi_proto_forward.1} parent=1 // pred_check
      _
    $region15: #{_multi_proto_forward.1} parent=1 // pred_check_branch
      %36 = sbr.rel (0) target = $region17
    $region16: #{_multi_proto_forward.1} parent=1 // pred_region
      %37 = dma.done [#allocation6], 256
    $region17: #{_multi_proto_forward.1} parent=1 // pred_fallthru
      _
    %v39 = vld [vmem:[#allocation2] sm:$0xff]
    %v40 = vpack.c.bf16 %v39, %v39
    %v41 = vld [vmem:[#allocation5] sm:$0xf]
    %v42 = vld [vmem:[#allocation5 + $0x4] sm:$0xf]
    %v43 = vld [vmem:[#allocation5 + $0x8] sm:$0xf]
    %v44 = vld [vmem:[#allocation5 + $0xc] sm:$0xf]
    %v49 = vunpack.c.l.b16 %v41
    %v50 = vunpack.c.l.b16 %v42
    %v51 = vunpack.c.l.b16 %v43
    %v52 = vunpack.c.l.b16 %v44
    %v53 = vpack.c.b16 %v50, %v49
    %v54 = vpack.c.b16 %v52, %v51
    %vm57 = vcmask 261120
    %v59 = vsel %vm57, %v40, 0
    %61 = vmatprep.subr.bf16.mxu0 0
    %62 = vmatpush1.bf16.msra.mxu0 %v53
    %63 = vmatprep.subr.bf16.mxu0 0
    %64 = vmatpush1.bf16.msra.mxu0 %v54
    %65 = vmatprep.subr.bf16.mxu0 0
    %66 = vmatpush1.bf16.msra.mxu0 0
    %67 = vmatprep.subr.bf16.mxu0 0
    %68 = vmatpush1.bf16.msra.mxu0 0
    %69 = vmatprep.subr.bf16.mxu0 0
    %70 = vmatpush1.bf16.msra.mxu0 0
    %71 = vmatprep.subr.bf16.mxu0 0
    %72 = vmatpush1.bf16.msra.mxu0 0
    %73 = vmatprep.subr.bf16.mxu0 0
    %74 = vmatpush1.bf16.msra.mxu0 0
    %75 = vmatprep.subr.bf16.mxu0 0
    %76 = vmatpush1.bf16.msra.mxu0 0
    %77 = vmatprep.subr.bf16.mxu0 0
    %78 = vmatpush1.bf16.msra.mxu0 0
    %79 = vmatprep.subr.bf16.mxu0 0
    %80 = vmatpush1.bf16.msra.mxu0 0
    %81 = vmatprep.subr.bf16.mxu0 0
    %82 = vmatpush1.bf16.msra.mxu0 0
    %83 = vmatprep.subr.bf16.mxu0 0
    %84 = vmatpush1.bf16.msra.mxu0 0
    %85 = vmatprep.subr.bf16.mxu0 0
    %86 = vmatpush1.bf16.msra.mxu0 0
    %87 = vmatprep.subr.bf16.mxu0 0
    %88 = vmatpush1.bf16.msra.mxu0 0
    %89 = vmatprep.subr.bf16.mxu0 0
    %90 = vmatpush1.bf16.msra.mxu0 0
    %91 = vmatprep.subr.bf16.mxu0 0
    %92 = vmatpush1.bf16.msra.mxu0 0
    %93 = vmatprep.mubr.bf16.mxu0 0
    %94 = vmatmul.mubr.bf16.gmra.mrb[0].mxu0 %v59
    %v95 = vpop.f32.mrb[0].mxu0
    %v96 = vadd.f32 0.0, %v95
    %v97 = vpop.f32.mrb[0].mxu0
    %v98 = vpop.f32.mrb[0].mxu0
    %v99 = vpop.f32.mrb[0].mxu0
    %100 = vdwg.mxu0
    %101 = vst [vmem:[#allocation7] sm:$0xff] %v96
    // Predicated region
    $region18: #{_multi_proto_forward.1} parent=1 // pred_check
      _
    $region19: #{_multi_proto_forward.1} parent=1 // pred_check_branch
      %103 = sbr.rel (0) target = $region21
    $region20: #{_multi_proto_forward.1} parent=1 // pred_region
      %s105 = ssub.s32 128, 128
      %106 = vsyncadd [#allocation4], %s105
      %s108 = sshll.u32 [#allocation7], 4
      %s109 = int_to_ptr.vmem [resolvable:$true] %s108
      %111 = dma.vmem_to_hbm [thread:$0]  %s109, 128, %s2, [#allocation4]
    $region21: #{_multi_proto_forward.1} parent=1 // pred_fallthru
      _
    // Predicated region
    $region22: #{_multi_proto_forward.1} parent=1 // pred_check
      _
    $region23: #{_multi_proto_forward.1} parent=1 // pred_check_branch
      %113 = sbr.rel (0) target = $region25
    $region24: #{_multi_proto_forward.1} parent=1 // pred_region
      %114 = dma.done [#allocation4], 128
    $region25: #{_multi_proto_forward.1} parent=1 // pred_fallthru
      _
    %115 = vsyncpa [#allocation3], 1
    %116 = vsyncpa [#allocation6], 1
    %117 = vsyncpa [#allocation4], 1

</llo_original>
